<compile_context>
chip_gen: v5e
topology: v5e:2x2
jax: 0.10.0
libtpu: 0.0.40
codegen_flags: <defaults>
</compile_context>

<pallas_src>
import jax
import jax.numpy as jnp
from jax.experimental import pallas as pl
from jax.experimental.pallas import tpu as pltpu


def _relu6_kernel(x_ref, o_ref):
    # ReLU6(x) = min(max(x, 0), 6), done on the VPU in one pass.
    o_ref[...] = jnp.clip(x_ref[...], 0.0, 6.0)


def _lane_dense_2d(total: int) -> tuple[int, int]:
    """Pick (rows, cols) so the last (lane) dim is wide and nearly 128-dense."""
    for rows in (8, 4, 2, 1):
        if total % rows == 0 and total // rows >= 128:
            return rows, total // rows
    return 1, total


def relu6_pallas(x_nchw: jax.Array) -> jax.Array:
    n, c, h, w = x_nchw.shape
    total = n * c * h * w
    rows, cols = _lane_dense_2d(total)

    # NCHW buffer is contiguous -> zero-copy reshape to a lane-dense 2-D slab.
    x2d = x_nchw.reshape(rows, cols)

    out2d = pl.pallas_call(
        _relu6_kernel,
        out_shape=jax.ShapeDtypeStruct(x2d.shape, x2d.dtype),
        grid_spec=pltpu.PrefetchScalarGridSpec(
            num_scalar_prefetch=0,
            grid=(1,),
            # Full-array block (block_shape == array dims), so the (8, 128)
            # divisibility constraint does not apply; no tiling needed at
            # this size on any TPU generation.
            in_specs=[pl.BlockSpec((rows, cols), lambda i: (0, 0))],
            out_specs=pl.BlockSpec((rows, cols), lambda i: (0, 0)),
        ),
        compiler_params=pltpu.CompilerParams(
            dimension_semantics=("arbitrary",),
        ),
    )(x2d)

    return out2d.reshape(n, c, h, w)


if __name__ == "__main__":
    key = jax.random.PRNGKey(0)
    # Same shape the PyTorch module uses: [1, 960, 7, 7], NCHW.
    x = jax.random.normal(key, (1, 960, 7, 7), dtype=jnp.float32) * 4.0

    y = relu6_pallas(x)
    jax.block_until_ready(y)

    # Correctness check against plain-JAX reference.
    y_ref = jnp.clip(x, 0.0, 6.0)
    assert y.shape == x.shape and y.dtype == x.dtype
    assert jnp.allclose(y, y_ref), "mismatch vs reference ReLU6"

    print("KERNEL_OK")
</pallas_src>

<mosaic_0001>
module attributes {stable_mosaic.version = 11 : i64} {
  func.func @_relu6_kernel(%arg0: i32, %arg1: memref<8x5880xf32, #tpu.memory_space<vmem>>, %arg2: memref<8x5880xf32, #tpu.memory_space<vmem>>) attributes {dimension_semantics = [#tpu.dimension_semantics<arbitrary>], iteration_bounds = array<i64: 1>, scalar_prefetch = 0 : i64, scratch_operands = 0 : i64, tpu.core_type = #tpu.core_type<tc>, window_params = [{pipeline_mode = #tpu.pipeline_mode<synchronous>, transform_indices = @transform_0, window_bounds = array<i64: 8, 5880>}, {pipeline_mode = #tpu.pipeline_mode<synchronous>, transform_indices = @transform_1, window_bounds = array<i64: 8, 5880>}]} {
    %c0 = arith.constant 0 : index
    %c0_0 = arith.constant 0 : index
    %0 = vector.load %arg1[%c0, %c0_0] : memref<8x5880xf32, #tpu.memory_space<vmem>>, vector<8x5880xf32>
    %cst = arith.constant 0.000000e+00 : f32
    %cst_1 = arith.constant 6.000000e+00 : f32
    %1 = vector.broadcast %cst : f32 to vector<8x5880xf32>
    %2 = arith.maximumf %1, %0 : vector<8x5880xf32>
    %3 = vector.broadcast %cst_1 : f32 to vector<8x5880xf32>
    %4 = arith.minimumf %3, %2 : vector<8x5880xf32>
    %c0_2 = arith.constant 0 : index
    %c0_3 = arith.constant 0 : index
    %5 = vector.load %arg2[%c0_2, %c0_3] : memref<8x5880xf32, #tpu.memory_space<vmem>>, vector<8x5880xf32>
    tpu.vector_store %arg2[%c0_2, %c0_3], %4 {strides = array<i32>} : memref<8x5880xf32, #tpu.memory_space<vmem>>, vector<8x5880xf32>,
    return
  }
  func.func @transform_0(%arg0: i32) -> (i32, i32) {
    %c0_i32 = arith.constant 0 : i32
    %c0_i32_0 = arith.constant 0 : i32
    %c0_i32_1 = arith.constant 0 : i32
    return %c0_i32, %c0_i32_0 : i32, i32
  }
  func.func @transform_1(%arg0: i32) -> (i32, i32) {
    %c0_i32 = arith.constant 0 : i32
    %c0_i32_0 = arith.constant 0 : i32
    %c0_i32_1 = arith.constant 0 : i32
    return %c0_i32, %c0_i32_0 : i32, i32
  }
}

</mosaic_0001>

<llo_original>
// kernel: tpu_custom_call.1
$region0: #{tpu_custom_call.1}
  #allocation0 [shape = 'u32[]', space=smem, size = 0x4, offset = 0x4, fixed_abs, tag = 'smem constant byte address 0x4 - core index']
  #allocation1 [shape = 'u32[72,128]{1,0:T(1,128)}', space=vmem, size = 0x9000, scoped, tag = 'internal scratch']
  %s0 = inlined_call_operand.hbm [shape: f32[8,5880], index: 0, kind: input, shape index: {}]
  %s1 = inlined_call_operand.hbm [shape: f32[8,5880], index: 1, kind: output, shape index: {}]
  %s2 = sld [smem:[#allocation0]]
  $region18: #{tpu_custom_call.1} parent=0
    _
  %s4 = ssub.s32 1, %s2
  %s5 = scalar_select 0, %s4, %s2
  $region1: #{tpu_custom_call.1} parent=0
    #allocation2 [shape = 'u8[188416]{0}', space=vmem, size = 0x2e000, scoped, tag = 'input window, operand 0, single buffered']
    #allocation3 [shape = 's32[1]{0}', space=sflag, size = 0x4, scoped, tag = 'scoped memory for tpu_custom_call.1']
    #allocation4 [shape = 's32[1]{0}', space=sflag, size = 0x4, scoped, tag = 'scoped memory for tpu_custom_call.1']
    #allocation5 [shape = 'u8[188416]{0}', space=vmem, size = 0x2e000, scoped, tag = 'output window, operand 0, single buffered']
    %6 = vsyncpa [#allocation3], 0
    %7 = vsyncpa [#allocation4], 0
    // Predicated region
    $region2: #{tpu_custom_call.1} parent=1 // pred_check
      _
    $region3: #{tpu_custom_call.1} parent=1 // pred_check_branch
      %9 = sbr.rel (0) target = $region5
    $region4: #{tpu_custom_call.1} parent=1 // pred_region
      %11 = vsyncadd [#allocation3], 0
      %s13 = sshll.u32 %s0, 4
      %s14 = int_to_ptr.hbm [resolvable:$true] %s13
      %s15 = sshll.u32 [#allocation2], 4
      %s16 = int_to_ptr.vmem [resolvable:$true] %s15
      %18 = dma.hbm_to_vmem [thread:$0]  %s14, 5888, %s16, [#allocation3]
    $region5: #{tpu_custom_call.1} parent=1 // pred_fallthru
      _
    // Predicated region
    $region6: #{tpu_custom_call.1} parent=1 // pred_check
      _
    $region7: #{tpu_custom_call.1} parent=1 // pred_check_branch
      %20 = sbr.rel (0) target = $region9
    $region8: #{tpu_custom_call.1} parent=1 // pred_region
      %22 = dma.done [#allocation3], 5888
    $region9: #{tpu_custom_call.1} parent=1 // pred_fallthru
      _
    %v23 = vld [vmem:[#allocation2] sm:$0xff]
    %v24 = vld [vmem:[#allocation2 + $0x8] sm:$0xff]
    %v25 = vld [vmem:[#allocation2 + $0x10] sm:$0xff]
    %v26 = vld [vmem:[#allocation2 + $0x18] sm:$0xff]
    %v27 = vld [vmem:[#allocation2 + $0x20] sm:$0xff]
    %v28 = vld [vmem:[#allocation2 + $0x28] sm:$0xff]
    %v29 = vld [vmem:[#allocation2 + $0x30] sm:$0xff]
    %v30 = vld [vmem:[#allocation2 + $0x38] sm:$0xff]
    %v31 = vld [vmem:[#allocation2 + $0x40] sm:$0xff]
    %v32 = vld [vmem:[#allocation2 + $0x48] sm:$0xff]
    %v33 = vld [vmem:[#allocation2 + $0x50] sm:$0xff]
    %v34 = vld [vmem:[#allocation2 + $0x58] sm:$0xff]
    %v35 = vld [vmem:[#allocation2 + $0x60] sm:$0xff]
    %v36 = vld [vmem:[#allocation2 + $0x68] sm:$0xff]
    %v37 = vld [vmem:[#allocation2 + $0x70] sm:$0xff]
    %v38 = vld [vmem:[#allocation2 + $0x78] sm:$0xff]
    %v39 = vld [vmem:[#allocation2 + $0x80] sm:$0xff]
    %v40 = vld [vmem:[#allocation2 + $0x88] sm:$0xff]
    %v41 = vld [vmem:[#allocation2 + $0x90] sm:$0xff]
    %v42 = vld [vmem:[#allocation2 + $0x98] sm:$0xff]
    %v43 = vld [vmem:[#allocation2 + $0xa0] sm:$0xff]
    %v44 = vld [vmem:[#allocation2 + $0xa8] sm:$0xff]
    %v45 = vld [vmem:[#allocation2 + $0xb0] sm:$0xff]
    %v46 = vld [vmem:[#allocation2 + $0xb8] sm:$0xff]
    %v47 = vld [vmem:[#allocation2 + $0xc0] sm:$0xff]
    %v48 = vld [vmem:[#allocation2 + $0xc8] sm:$0xff]
    %v49 = vld [vmem:[#allocation2 + $0xd0] sm:$0xff]
    %v50 = vld [vmem:[#allocation2 + $0xd8] sm:$0xff]
    %v51 = vld [vmem:[#allocation2 + $0xe0] sm:$0xff]
    %v52 = vld [vmem:[#allocation2 + $0xe8] sm:$0xff]
    %v53 = vld [vmem:[#allocation2 + $0xf0] sm:$0xff]
    %v54 = vld [vmem:[#allocation2 + $0xf8] sm:$0xff]
    %v55 = vld [vmem:[#allocation2 + $0x100] sm:$0xff]
    %v56 = vld [vmem:[#allocation2 + $0x108] sm:$0xff]
    %v57 = vld [vmem:[#allocation2 + $0x110] sm:$0xff]
    %v58 = vld [vmem:[#allocation2 + $0x118] sm:$0xff]
    %v59 = vld [vmem:[#allocation2 + $0x120] sm:$0xff]
    %v60 = vld [vmem:[#allocation2 + $0x128] sm:$0xff]
    %v61 = vld [vmem:[#allocation2 + $0x130] sm:$0xff]
    %v62 = vld [vmem:[#allocation2 + $0x138] sm:$0xff]
    %v63 = vld [vmem:[#allocation2 + $0x140] sm:$0xff]
    %v64 = vld [vmem:[#allocation2 + $0x148] sm:$0xff]
    %v65 = vld [vmem:[#allocation2 + $0x150] sm:$0xff]
    %v66 = vld [vmem:[#allocation2 + $0x158] sm:$0xff]
    %v67 = vld [vmem:[#allocation2 + $0x160] sm:$0xff]
    %v68 = vld [vmem:[#allocation2 + $0x168] sm:$0xff]
    %v69 = vmax.f32 %v23, 0.0
    %v70 = vmax.f32 %v24, 0.0
    %v71 = vmax.f32 %v25, 0.0
    %v72 = vmax.f32 %v26, 0.0
    %v73 = vmax.f32 %v27, 0.0
    %v74 = vmax.f32 %v28, 0.0
    %v75 = vmax.f32 %v29, 0.0
    %v76 = vmax.f32 %v30, 0.0
    %v77 = vmax.f32 %v31, 0.0
    %v78 = vmax.f32 %v32, 0.0
    %v79 = vmax.f32 %v33, 0.0
    %v80 = vmax.f32 %v34, 0.0
    %v81 = vmax.f32 %v35, 0.0
    %v82 = vmax.f32 %v36, 0.0
    %v83 = vmax.f32 %v37, 0.0
    %v84 = vmax.f32 %v38, 0.0
    %v85 = vmax.f32 %v39, 0.0
    %v86 = vmax.f32 %v40, 0.0
    %v87 = vmax.f32 %v41, 0.0
    %v88 = vmax.f32 %v42, 0.0
    %v89 = vmax.f32 %v43, 0.0
    %v90 = vmax.f32 %v44, 0.0
    %v91 = vmax.f32 %v45, 0.0
    %v92 = vmax.f32 %v46, 0.0
    %v93 = vmax.f32 %v47, 0.0
    %v94 = vmax.f32 %v48, 0.0
    %v95 = vmax.f32 %v49, 0.0
    %v96 = vmax.f32 %v50, 0.0
    %v97 = vmax.f32 %v51, 0.0
    %v98 = vmax.f32 %v52, 0.0
    %v99 = vmax.f32 %v53, 0.0
    %v100 = vmax.f32 %v54, 0.0
    %v101 = vmax.f32 %v55, 0.0
    %v102 = vmax.f32 %v56, 0.0
    %v103 = vmax.f32 %v57, 0.0
    %v104 = vmax.f32 %v58, 0.0
    %v105 = vmax.f32 %v59, 0.0
    %v106 = vmax.f32 %v60, 0.0
    %v107 = vmax.f32 %v61, 0.0
    %v108 = vmax.f32 %v62, 0.0
    %v109 = vmax.f32 %v63, 0.0
    %v110 = vmax.f32 %v64, 0.0
    %v111 = vmax.f32 %v65, 0.0
    %v112 = vmax.f32 %v66, 0.0
    %v113 = vmax.f32 %v67, 0.0
    %v114 = vmax.f32 %v68, 0.0
    %v115 = vmin.f32 %v69, 6.0
    %v116 = vmin.f32 %v70, 6.0
    %v117 = vmin.f32 %v71, 6.0
    %v118 = vmin.f32 %v72, 6.0
    %v119 = vmin.f32 %v73, 6.0
    %v120 = vmin.f32 %v74, 6.0
    %v121 = vmin.f32 %v75, 6.0
    %v122 = vmin.f32 %v76, 6.0
    %v123 = vmin.f32 %v77, 6.0
    %v124 = vmin.f32 %v78, 6.0
    %v125 = vmin.f32 %v79, 6.0
    %v126 = vmin.f32 %v80, 6.0
    %v127 = vmin.f32 %v81, 6.0
    %v128 = vmin.f32 %v82, 6.0
    %v129 = vmin.f32 %v83, 6.0
    %v130 = vmin.f32 %v84, 6.0
    %v131 = vmin.f32 %v85, 6.0
    %v132 = vmin.f32 %v86, 6.0
    %v133 = vmin.f32 %v87, 6.0
    %v134 = vmin.f32 %v88, 6.0
    %v135 = vmin.f32 %v89, 6.0
    %v136 = vmin.f32 %v90, 6.0
    %v137 = vmin.f32 %v91, 6.0
    %v138 = vmin.f32 %v92, 6.0
    %v139 = vmin.f32 %v93, 6.0
    %v140 = vmin.f32 %v94, 6.0
    %v141 = vmin.f32 %v95, 6.0
    %v142 = vmin.f32 %v96, 6.0
    %v143 = vmin.f32 %v97, 6.0
    %v144 = vmin.f32 %v98, 6.0
    %v145 = vmin.f32 %v99, 6.0
    %v146 = vmin.f32 %v100, 6.0
    %v147 = vmin.f32 %v101, 6.0
    %v148 = vmin.f32 %v102, 6.0
    %v149 = vmin.f32 %v103, 6.0
    %v150 = vmin.f32 %v104, 6.0
    %v151 = vmin.f32 %v105, 6.0
    %v152 = vmin.f32 %v106, 6.0
    %v153 = vmin.f32 %v107, 6.0
    %v154 = vmin.f32 %v108, 6.0
    %v155 = vmin.f32 %v109, 6.0
    %v156 = vmin.f32 %v110, 6.0
    %v157 = vmin.f32 %v111, 6.0
    %v158 = vmin.f32 %v112, 6.0
    %v159 = vmin.f32 %v113, 6.0
    %v160 = vmin.f32 %v114, 6.0
    %161 = vst [vmem:[#allocation5] sm:$0xff] %v115
    %162 = vst [vmem:[#allocation5 + $0x8] sm:$0xff] %v116
    %163 = vst [vmem:[#allocation5 + $0x10] sm:$0xff] %v117
    %164 = vst [vmem:[#allocation5 + $0x18] sm:$0xff] %v118
    %165 = vst [vmem:[#allocation5 + $0x20] sm:$0xff] %v119
    %166 = vst [vmem:[#allocation5 + $0x28] sm:$0xff] %v120
    %167 = vst [vmem:[#allocation5 + $0x30] sm:$0xff] %v121
    %168 = vst [vmem:[#allocation5 + $0x38] sm:$0xff] %v122
    %169 = vst [vmem:[#allocation5 + $0x40] sm:$0xff] %v123
    %170 = vst [vmem:[#allocation5 + $0x48] sm:$0xff] %v124
    %171 = vst [vmem:[#allocation5 + $0x50] sm:$0xff] %v125
    %172 = vst [vmem:[#allocation5 + $0x58] sm:$0xff] %v126
    %173 = vst [vmem:[#allocation5 + $0x60] sm:$0xff] %v127
    %174 = vst [vmem:[#allocation5 + $0x68] sm:$0xff] %v128
    %175 = vst [vmem:[#allocation5 + $0x70] sm:$0xff] %v129
    %176 = vst [vmem:[#allocation5 + $0x78] sm:$0xff] %v130
    %177 = vst [vmem:[#allocation5 + $0x80] sm:$0xff] %v131
    %178 = vst [vmem:[#allocation5 + $0x88] sm:$0xff] %v132
    %179 = vst [vmem:[#allocation5 + $0x90] sm:$0xff] %v133
    %180 = vst [vmem:[#allocation5 + $0x98] sm:$0xff] %v134
    %181 = vst [vmem:[#allocation5 + $0xa0] sm:$0xff] %v135
    %182 = vst [vmem:[#allocation5 + $0xa8] sm:$0xff] %v136
    %183 = vst [vmem:[#allocation5 + $0xb0] sm:$0xff] %v137
    %184 = vst [vmem:[#allocation5 + $0xb8] sm:$0xff] %v138
    %185 = vst [vmem:[#allocation5 + $0xc0] sm:$0xff] %v139
    %186 = vst [vmem:[#allocation5 + $0xc8] sm:$0xff] %v140
    %187 = vst [vmem:[#allocation5 + $0xd0] sm:$0xff] %v141
    %188 = vst [vmem:[#allocation5 + $0xd8] sm:$0xff] %v142
    %189 = vst [vmem:[#allocation5 + $0xe0] sm:$0xff] %v143
    %190 = vst [vmem:[#allocation5 + $0xe8] sm:$0xff] %v144
    %191 = vst [vmem:[#allocation5 + $0xf0] sm:$0xff] %v145
    %192 = vst [vmem:[#allocation5 + $0xf8] sm:$0xff] %v146
    %193 = vst [vmem:[#allocation5 + $0x100] sm:$0xff] %v147
    %194 = vst [vmem:[#allocation5 + $0x108] sm:$0xff] %v148
    %195 = vst [vmem:[#allocation5 + $0x110] sm:$0xff] %v149
    %196 = vst [vmem:[#allocation5 + $0x118] sm:$0xff] %v150
    %197 = vst [vmem:[#allocation5 + $0x120] sm:$0xff] %v151
    %198 = vst [vmem:[#allocation5 + $0x128] sm:$0xff] %v152
    %199 = vst [vmem:[#allocation5 + $0x130] sm:$0xff] %v153
    %200 = vst [vmem:[#allocation5 + $0x138] sm:$0xff] %v154
    %201 = vst [vmem:[#allocation5 + $0x140] sm:$0xff] %v155
    %202 = vst [vmem:[#allocation5 + $0x148] sm:$0xff] %v156
    %203 = vst [vmem:[#allocation5 + $0x150] sm:$0xff] %v157
    %204 = vst [vmem:[#allocation5 + $0x158] sm:$0xff] %v158
    %205 = vst [vmem:[#allocation5 + $0x160] sm:$0xff] %v159
    %vm206 = vcmask 982016
    %207 = vst.msk [vmem:[#allocation5 + $0x168] sm:$0xff] %vm206, %v160
    // Predicated region
    $region10: #{tpu_custom_call.1} parent=1 // pred_check
      _
    $region11: #{tpu_custom_call.1} parent=1 // pred_check_branch
      %209 = sbr.rel (0) target = $region13
    $region12: #{tpu_custom_call.1} parent=1 // pred_region
      %211 = vsyncadd [#allocation4], 0
      %s213 = sshll.u32 [#allocation5], 4
      %s214 = int_to_ptr.vmem [resolvable:$true] %s213
      %s215 = sshll.u32 %s1, 4
      %s216 = int_to_ptr.hbm [resolvable:$true] %s215
      %218 = dma.vmem_to_hbm [thread:$0]  %s214, 5888, %s216, [#allocation4]
    $region13: #{tpu_custom_call.1} parent=1 // pred_fallthru
      _
    // Predicated region
    $region14: #{tpu_custom_call.1} parent=1 // pred_check
      _
    $region15: #{tpu_custom_call.1} parent=1 // pred_check_branch
      %220 = sbr.rel (0) target = $region17
    $region16: #{tpu_custom_call.1} parent=1 // pred_region
      %222 = dma.done [#allocation4], 5888
    $region17: #{tpu_custom_call.1} parent=1 // pred_fallthru
      _
    %223 = vsyncpa [#allocation3], 1
    %224 = vsyncpa [#allocation4], 1

</llo_original>
